<compile_context>
chip_gen: v5e
topology: v5e:2x2
jax: 0.10.0
libtpu: 0.0.40
codegen_flags: <defaults>
</compile_context>

<pallas_src>
import functools
import math

import jax
import jax.numpy as jnp
from jax import lax
from jax.experimental import pallas as pl
from jax.experimental.pallas import tpu as pltpu

GENRES = ['bc', 'bn', 'mz', 'nw', 'pt', 'tc', 'wb']
GENRE2INT = {g: gi for gi, g in enumerate(GENRES)}


def _round_up(x, m):
    return (x + m - 1) // m * m


def _cdiv(a, b):
    return (a + b - 1) // b


def _binomial_cdf_thresholds_31bit(n_samples, keep_p):
    """Inverse-CDF thresholds (31-bit fixed point) for Binomial(n_samples, keep_p).

    count = #{m : U31 >= CDF(m)} over m in [0, S) is Binomial(S, keep_p) distributed
    for U31 uniform on [0, 2^31).  Thresholds are clamped to 2^31-1 (a ~2^-31
    over-count probability when CDF rounds to 1.0 -- negligible).
    """
    drop_p = 1.0 - keep_p
    scale = 1 << 31
    acc = 0.0
    thresholds = []
    for m in range(n_samples):                       # CDF(0) .. CDF(S-1)
        acc += math.comb(n_samples, m) * (keep_p ** m) * (drop_p ** (n_samples - m))
        thresholds.append(min(int(round(acc * scale)), scale - 1))
    return thresholds


def _mc_pairwise_kernel(*refs, k, use_dropout, thresholds, inv_scale):
    """refs = (target, expand, table[, bits], out).

    target : [Tn, k]        int32   hot-column code per (word, antecedent-slot)
    expand : [k, 18k]       bf16    constant 0/1 lane-expansion matrix
    table  : [18k, k*3E]    bf16    block-diagonal fused embedding table
    bits   : [Tn, k*3E]     int32   uniform random integers in [0, 2^31)   (dropout only)
    out    : [Tn, k*3E]
    """
    if use_dropout:
        target_ref, expand_ref, table_ref, bits_ref, out_ref = refs
    else:
        target_ref, expand_ref, table_ref, out_ref = refs

    Tn = target_ref.shape[0]
    KC = 18 * k

    # ---- lane-expand target (Tn, k) -> (Tn, 18k) via a tiny bf16 MXU matmul -----
    # (integers <= 18k-1 = 143 are exact in bf16; each expand column has one 1)
    target = target_ref[...].astype(jnp.bfloat16)
    target_rep = jnp.dot(target, expand_ref[...],
                         preferred_element_type=jnp.float32)          # (Tn, KC) f32, exact

    col = lax.broadcasted_iota(jnp.int32, (Tn, KC), 1).astype(jnp.float32)
    onehot = (jnp.abs(col - target_rep) < 0.5).astype(jnp.bfloat16)   # (Tn, KC)

    # ---- fused lookups + concat: ONE bf16 MXU matmul, lane-dense (Tn, k*3E) -----
    feat = jnp.dot(onehot, table_ref[...], preferred_element_type=jnp.float32)

    # ---- MC dropout: mean_s(dropout_s(feat)) == feat * Binomial(S, keep_p)/(S*keep_p) ----
    if use_dropout:
        u31 = bits_ref[...]
        count = (u31 >= thresholds[0]).astype(jnp.int32)
        for t in thresholds[1:]:                       # S-1 more int32 compares/adds
            count = count + (u31 >= t).astype(jnp.int32)
        feat = feat * (count.astype(jnp.float32) * inv_scale)

    out_ref[...] = feat.astype(out_ref.dtype)


def mc_dropout_pairwise_encoder(top_indices, speaker_map, genre_idx, seed,
                                spk_emb, dist_emb, genre_emb,
                                *, n_samples, dropout_rate, tile_n=None,
                                out_dtype=jnp.float32):
    """Pallas implementation of MCDropoutPairwiseEncoder.forward -> [n, k, 3E].

    Set out_dtype=jnp.bfloat16 to halve the output HBM/store traffic if the
    downstream scorer tolerates it (dropout math stays in int32/f32 in-kernel).
    """
    n, k = top_indices.shape
    E = spk_emb.shape[1]
    emb3 = 3 * E
    KC = 18 * k

    top_indices = top_indices.astype(jnp.int32)
    speaker_map = speaker_map.astype(jnp.int32)

    # --- XLA glue: same-speaker gather + integer distance bucketing + hot-column codes ---
    same = (speaker_map[top_indices] == speaker_map[:, None]).astype(jnp.int32)   # (n, k)
    word_ids = jnp.arange(n, dtype=jnp.int32)
    dist = jnp.maximum(word_ids[:, None] - top_indices, 1)            # clamp_min_(1)
    # floor(log2(dist)) clamped to 6 via compare-sum (integer-only, exact)
    logd = ((dist >= 2).astype(jnp.int32) + (dist >= 4).astype(jnp.int32)
            + (dist >= 8).astype(jnp.int32) + (dist >= 16).astype(jnp.int32)
            + (dist >= 32).astype(jnp.int32) + (dist >= 64).astype(jnp.int32))
    bucket = jnp.where(dist < 5, dist - 1, logd + 2)                  # in [0, 8]
    code = same * 9 + bucket                                          # in [0, 18)
    target = code + 18 * jnp.arange(k, dtype=jnp.int32)[None, :]      # hot col in [0, 18k)

    # --- fused (18, 3E) table: row (s*9+b) = [spk_emb[s] | dist_emb[b] | genre_row] ---
    s_idx = jnp.arange(18, dtype=jnp.int32) // 9
    b_idx = jnp.arange(18, dtype=jnp.int32) % 9
    genre_row = genre_emb[genre_idx].astype(jnp.float32)[None, :]
    small = jnp.concatenate([spk_emb[s_idx].astype(jnp.float32),
                             dist_emb[b_idx].astype(jnp.float32),
                             jnp.broadcast_to(genre_row, (18, E))], axis=1)        # (18, 3E)
    # block-diagonal replication over the k antecedent slots, stored bf16 -> one MXU pass
    table = jnp.kron(jnp.eye(k, dtype=jnp.float32), small).astype(jnp.bfloat16)    # (18k, k*3E)

    # constant 0/1 lane-expansion matrix (k, 18k): column c belongs to slot c // 18
    expand = (jnp.arange(k, dtype=jnp.int32)[:, None]
              == (jnp.arange(KC, dtype=jnp.int32)[None, :] // 18)).astype(jnp.bfloat16)

    # --- tiling: >=2 grid steps so v7x's 2nd TensorCore gets work; cap 512 rows/step ---
    if tile_n is None:
        n8 = _round_up(max(n, 1), 8)
        tile_n = min(_round_up(_cdiv(n8, 2), 8), 512)
    tile_n = max(_round_up(tile_n, 8), 8)
    n_pad = _round_up(max(n, 1), tile_n)
    target_p = jnp.zeros((n_pad, k), jnp.int32).at[:n].set(target)

    use_dropout = (dropout_rate > 0.0) and (n_samples > 0)
    thresholds = ()
    inv_scale = 1.0
    args = [target_p, expand, table]
    in_specs = [
        pl.BlockSpec((tile_n, k), lambda i: (i, 0)),          # hot-column codes
        pl.BlockSpec((k, KC), lambda i: (0, 0)),              # constant expand matrix
        pl.BlockSpec((KC, k * emb3), lambda i: (0, 0)),       # fused block-diag table
    ]
    if use_dropout:
        keep_p = 1.0 - float(dropout_rate)
        thresholds = tuple(_binomial_cdf_thresholds_31bit(int(n_samples), keep_p))
        inv_scale = 1.0 / (int(n_samples) * keep_p)
        # Uniform 31-bit randoms drawn with jax.random (pltpu.prng_* has no
        # interpret/CPU lowering); one draw per output element.
        key = jax.random.PRNGKey(int(seed))
        bits = jax.random.bits(key, (n_pad, k * emb3), dtype=jnp.uint32)
        u31 = (bits >> 1).astype(jnp.int32)                    # in [0, 2^31)
        args.append(u31)
        in_specs.append(pl.BlockSpec((tile_n, k * emb3), lambda i: (i, 0)))

    kernel = functools.partial(_mc_pairwise_kernel, k=k, use_dropout=use_dropout,
                               thresholds=thresholds, inv_scale=float(inv_scale))

    out2d = pl.pallas_call(
        kernel,
        out_shape=jax.ShapeDtypeStruct((n_pad, k * emb3), out_dtype),
        grid=(n_pad // tile_n,),
        in_specs=in_specs,
        out_specs=pl.BlockSpec((tile_n, k * emb3), lambda i: (i, 0)),
        compiler_params=pltpu.CompilerParams(
            dimension_semantics=("parallel",),        # shard word-tiles over TCs (v7x)
            vmem_limit_bytes=48 * 1024 * 1024),       # headroom, still under v7x 64 MiB
    )(*args)

    # lane-dense (n_pad, k*3E) -> (n, k, 3E): trivial row-major split, done in XLA.
    return out2d[:n].reshape(n, k, emb3)


def reference_no_dropout(top_indices, speaker_map, genre_idx, spk_emb, dist_emb, genre_emb):
    """Plain-JAX reference of a single run() with dropout disabled."""
    n, k = top_indices.shape
    word_ids = jnp.arange(n)
    same = (speaker_map[top_indices] == speaker_map[:, None]).astype(jnp.int32)
    spk = spk_emb[same]
    dist = jnp.maximum(word_ids[:, None] - word_ids[top_indices], 1)
    logd = jnp.minimum(jnp.floor(jnp.log2(dist.astype(jnp.float32))), 6.0).astype(jnp.int32)
    bucket = jnp.where(dist < 5, dist - 1, logd + 2)
    d = dist_emb[bucket]
    g = jnp.broadcast_to(genre_emb[genre_idx][None, None, :], (n, k, genre_emb.shape[1]))
    return jnp.concatenate([spk, d, g], axis=-1)


if __name__ == "__main__":
    # small shapes: n_words=16, k (top antecedents)=8, embedding_size=32
    n_words, k, emb_size = 16, 8, 32
    n_samples = 4          # config.active_learning.parameters_samples
    dropout_rate = 0.4     # config.training_params.dropout_rate

    key = jax.random.PRNGKey(0)
    k_g, k_d, k_s, k_top, k_spk = jax.random.split(key, 5)

    # nn.Embedding default init: N(0, 1)
    genre_emb = jax.random.normal(k_g, (7, emb_size), jnp.float32)
    dist_emb = jax.random.normal(k_d, (9, emb_size), jnp.float32)
    spk_emb = jax.random.normal(k_s, (2, emb_size), jnp.float32)

    top_indices = jax.random.randint(k_top, (n_words, k), 0, n_words, jnp.int32)
    speaker_map = jax.random.randint(k_spk, (n_words,), 0, 3, jnp.int32)
    genre_idx = GENRE2INT['nw']   # doc.document_id[:2] == 'nw'

    # correctness: with dropout_rate=0 the MC-mean equals a single clean run()
    out_clean = mc_dropout_pairwise_encoder(
        top_indices, speaker_map, genre_idx, seed=1234,
        spk_emb=spk_emb, dist_emb=dist_emb, genre_emb=genre_emb,
        n_samples=n_samples, dropout_rate=0.0)
    ref = reference_no_dropout(top_indices, speaker_map, genre_idx,
                               spk_emb, dist_emb, genre_emb)
    assert out_clean.shape == (n_words, k, 3 * emb_size)
    max_err = float(jnp.max(jnp.abs(out_clean - ref)))
    # tolerance covers bf16 rounding of the fused embedding table (N(0,1) values)
    assert max_err < 2e-2, f"kernel mismatch vs reference: {max_err}"

    # real MC-dropout forward
    out = mc_dropout_pairwise_encoder(
        top_indices, speaker_map, genre_idx, seed=1234,
        spk_emb=spk_emb, dist_emb=dist_emb, genre_emb=genre_emb,
        n_samples=n_samples, dropout_rate=dropout_rate)
    jax.block_until_ready(out)
    assert out.shape == (n_words, k, 3 * emb_size)
    assert bool(jnp.all(jnp.isfinite(out)))

    # every element must equal feat * m / (S*(1-p)) for an integer kept-count m in [0, S]
    scale = n_samples * (1.0 - dropout_rate)
    ok = jnp.abs(ref) > 0.1
    denom = jnp.where(ok, ref, 1.0)
    m_est = jnp.where(ok, out / denom * scale, 0.0)
    m_round = jnp.round(m_est)
    assert bool(jnp.all(jnp.abs(m_est - m_round) < 0.05))
    assert bool(jnp.all((m_round >= -0.5) & (m_round <= n_samples + 0.5)))

    print("KERNEL_OK")
</pallas_src>

<mosaic_0001>
module attributes {stable_mosaic.version = 11 : i64} {
  func.func @_mc_pairwise_kernel(%arg0: i32, %arg1: memref<8x8xi32, #tpu.memory_space<vmem>>, %arg2: memref<8x144xbf16, #tpu.memory_space<vmem>>, %arg3: memref<144x768xbf16, #tpu.memory_space<vmem>>, %arg4: memref<8x768xf32, #tpu.memory_space<vmem>>) attributes {dimension_semantics = [#tpu.dimension_semantics<parallel>], iteration_bounds = array<i64: 2>, scalar_prefetch = 0 : i64, scratch_operands = 0 : i64, tpu.core_type = #tpu.core_type<tc>, window_params = [{transform_indices = @transform_0, window_bounds = array<i64: 8, 8>}, {pipeline_mode = #tpu.pipeline_mode<synchronous>, transform_indices = @transform_1, window_bounds = array<i64: 8, 144>}, {pipeline_mode = #tpu.pipeline_mode<synchronous>, transform_indices = @transform_2, window_bounds = array<i64: 144, 768>}, {transform_indices = @transform_3, window_bounds = array<i64: 8, 768>}]} {
    %c0 = arith.constant 0 : index
    %c0_0 = arith.constant 0 : index
    %0 = vector.load %arg1[%c0, %c0_0] : memref<8x8xi32, #tpu.memory_space<vmem>>, vector<8x8xi32>
    %1 = arith.sitofp %0 : vector<8x8xi32> to vector<8x8xbf16>
    %c0_1 = arith.constant 0 : index
    %c0_2 = arith.constant 0 : index
    %2 = vector.load %arg2[%c0_1, %c0_2] : memref<8x144xbf16, #tpu.memory_space<vmem>>, vector<8x144xbf16>
    %cst = arith.constant dense<0.000000e+00> : vector<8x144xf32>
    %3 = tpu.matmul %1, %2, %cst {dimension_numbers = #tpu.dot_dimension_numbers<[1], [0], [0], [1], [0, 0, 1, 1], [], []>} : vector<8x8xbf16>, vector<8x144xbf16>, vector<8x144xf32> -> vector<8x144xf32>
    %4 = tpu.iota {dimensions = array<i32: 1>} : vector<8x144xi32>
    %5 = arith.sitofp %4 : vector<8x144xi32> to vector<8x144xf32>
    %6 = arith.subf %5, %3 : vector<8x144xf32>
    %7 = math.absf %6 : vector<8x144xf32>
    %cst_3 = arith.constant 5.000000e-01 : f32
    %8 = vector.broadcast %cst_3 : f32 to vector<8x144xf32>
    %9 = arith.cmpf olt, %7, %8 : vector<8x144xf32>
    %10 = arith.extui %9 : vector<8x144xi1> to vector<8x144xi32>
    %11 = arith.sitofp %10 : vector<8x144xi32> to vector<8x144xf32>
    %12 = arith.truncf %11 : vector<8x144xf32> to vector<8x144xbf16>
    %c0_4 = arith.constant 0 : index
    %c0_5 = arith.constant 0 : index
    %13 = vector.load %arg3[%c0_4, %c0_5] : memref<144x768xbf16, #tpu.memory_space<vmem>>, vector<144x768xbf16>
    %cst_6 = arith.constant dense<0.000000e+00> : vector<8x768xf32>
    %14 = tpu.matmul %12, %13, %cst_6 {dimension_numbers = #tpu.dot_dimension_numbers<[1], [0], [0], [1], [0, 0, 1, 1], [], []>} : vector<8x144xbf16>, vector<144x768xbf16>, vector<8x768xf32> -> vector<8x768xf32>
    %c0_7 = arith.constant 0 : index
    %c0_8 = arith.constant 0 : index
    %15 = vector.load %arg4[%c0_7, %c0_8] : memref<8x768xf32, #tpu.memory_space<vmem>>, vector<8x768xf32>
    tpu.vector_store %arg4[%c0_7, %c0_8], %14 {strides = array<i32>} : memref<8x768xf32, #tpu.memory_space<vmem>>, vector<8x768xf32>,
    return
  }
  func.func @transform_0(%arg0: i32) -> (i32, i32) {
    %c0_i32 = arith.constant 0 : i32
    %c0_i32_0 = arith.constant 0 : i32
    return %arg0, %c0_i32 : i32, i32
  }
  func.func @transform_1(%arg0: i32) -> (i32, i32) {
    %c0_i32 = arith.constant 0 : i32
    %c0_i32_0 = arith.constant 0 : i32
    %c0_i32_1 = arith.constant 0 : i32
    return %c0_i32, %c0_i32_0 : i32, i32
  }
  func.func @transform_2(%arg0: i32) -> (i32, i32) {
    %c0_i32 = arith.constant 0 : i32
    %c0_i32_0 = arith.constant 0 : i32
    %c0_i32_1 = arith.constant 0 : i32
    return %c0_i32, %c0_i32_0 : i32, i32
  }
  func.func @transform_3(%arg0: i32) -> (i32, i32) {
    %c0_i32 = arith.constant 0 : i32
    %c0_i32_0 = arith.constant 0 : i32
    return %arg0, %c0_i32 : i32, i32
  }
}

</mosaic_0001>

<llo_original>
// kernel: tpu_custom_call.1
$region0: #{tpu_custom_call.1}
  #allocation0 [shape = 'u32[]', space=smem, size = 0x4, offset = 0x4, fixed_abs, tag = 'smem constant byte address 0x4 - core index']
  #allocation1 [shape = 'u32[72,128]{1,0:T(1,128)}', space=vmem, size = 0x9000, scoped, tag = 'internal scratch']
  %s0 = inlined_call_operand.vmem [shape: s32[16,8], index: 0, kind: input, shape index: {}]
  %s1 = inlined_call_operand.vmem [shape: bf16[8,144], index: 1, kind: input, shape index: {}]
  %s2 = inlined_call_operand.hbm [shape: bf16[144,768], index: 2, kind: input, shape index: {}]
  %s3 = inlined_call_operand.hbm [shape: f32[16,768], index: 3, kind: output, shape index: {}]
  %s4 = sld [smem:[#allocation0]]
  $region49: #{tpu_custom_call.1} parent=0
    _
  %s6 = ssub.s32 1, %s4
  %s7 = scalar_select 0, %s6, %s4
  $region1: #{tpu_custom_call.1} parent=0
    #allocation2 [shape = 'u8[221184]{0}', space=vmem, size = 0x36000, scoped, tag = 'input window, operand 2, single buffered']
    #allocation3 [shape = 's32[2]{0}', space=sflag, size = 0x8, scoped, tag = 'scoped memory for tpu_custom_call.1']
    #allocation4 [shape = 's32[2]{0}', space=sflag, size = 0x8, scoped, tag = 'scoped memory for tpu_custom_call.1']
    #allocation5 [shape = 'u8[49152]{0}', space=vmem, size = 0xc000, scoped, tag = 'output window, operand 0']
    %8 = vsyncpa [#allocation3], 0
    %9 = vsyncpa [#allocation4], 0
    %s10 = scalar_lea.sflag [#allocation4], 1
    %11 = vsyncpa %s10, 0
    loop: start=0, step=1, limit=4
    $region2: #{tpu_custom_call.1} parent=1 // loop_pre_header
      _
    $region3: #{tpu_custom_call.1} parent=1 // loop_header
      %s13 = sphi 0, %s17
      %p14 = scmp.ge.s32.totalorder %s13, 4
      %s23 = sphi 0, %s25
      %s26 = sphi 0, %s23
      %s27 = sphi 0, %s26
      %s43 = sphi 0, %s27
      %s47 = sphi 0, %s47
      %s49 = sphi 0, %s47
      %s50 = sphi 0, %s49
      %s64 = sphi 0, %s50
      %s68 = sphi 0, %s68
      %s70 = sphi 0, %s68
      %s71 = sphi 0, %s70
      %s85 = sphi 0, %s71
      %s91 = sphi 0, %s93
      %s94 = sphi 0, %s91
      %s95 = sphi 0, %s94
      %s111 = sphi 0, %s95
    $region4: #{tpu_custom_call.1} parent=1 // loop_header_branch
      %16 = sbr.rel (%p14) target = $region8
    $region5: #{tpu_custom_call.1} parent=1 // loop_body
      %s18 = ssub.s32 %s13, 1
      %s19 = ssub.s32 %s13, 2
      %s20 = sadd.s32 %s13, 1
      %s21 = ssub.s32 %s13, %s20
      %p22 = scmp.eq.s32.totalorder %s21, 0
      %s24 = sadd.s32 %s23, 1
      %s25 = scalar_select %p22, %s23, %s24
      %p28 = pneg %p22
      %p29 = scmp.eq.s32.totalorder %s13, 1
      %p30 = por %p28, %p29
      %p31 = scmp.ne.s32.totalorder %s23, %s26
      %p32 = scmp.eq.s32.totalorder %s13, 0
      %p33 = por %p31, %p32
      %p34 = scmp.ne.s32.totalorder %s23, %s26
      %p35 = scmp.eq.s32.totalorder %s18, 1
      %p36 = por %p34, %p35
      %p37 = scmp.ne.s32.totalorder %s26, %s27
      %p38 = scmp.eq.s32.totalorder %s18, 0
      %p39 = por %p37, %p38
      %p40 = scmp.ne.s32.totalorder %s26, %s27
      %p41 = scmp.eq.s32.totalorder %s19, 1
      %p42 = por %p40, %p41
      %p44 = scmp.ne.s32.totalorder %s27, %s43
      %p45 = scmp.eq.s32.totalorder %s19, 0
      %p46 = por %p44, %p45
      %s48 = sadd.s32 %s47, 1
      %p51 = scmp.eq.s32.totalorder %s13, 1
      %p52 = scmp.ne.s32.totalorder %s47, %s49
      %p53 = scmp.eq.s32.totalorder %s13, 0
      %p54 = por %p52, %p53
      %p55 = scmp.ne.s32.totalorder %s47, %s49
      %p56 = scmp.eq.s32.totalorder %s18, 1
      %p57 = por %p55, %p56
      %p58 = scmp.ne.s32.totalorder %s49, %s50
      %p59 = scmp.eq.s32.totalorder %s18, 0
      %p60 = por %p58, %p59
      %p61 = scmp.ne.s32.totalorder %s49, %s50
      %p62 = scmp.eq.s32.totalorder %s19, 1
      %p63 = por %p61, %p62
      %p65 = scmp.ne.s32.totalorder %s50, %s64
      %p66 = scmp.eq.s32.totalorder %s19, 0
      %p67 = por %p65, %p66
      %s69 = sadd.s32 %s68, 1
      %p72 = scmp.eq.s32.totalorder %s13, 1
      %p73 = scmp.ne.s32.totalorder %s68, %s70
      %p74 = scmp.eq.s32.totalorder %s13, 0
      %p75 = por %p73, %p74
      %p76 = scmp.ne.s32.totalorder %s68, %s70
      %p77 = scmp.eq.s32.totalorder %s18, 1
      %p78 = por %p76, %p77
      %p79 = scmp.ne.s32.totalorder %s70, %s71
      %p80 = scmp.eq.s32.totalorder %s18, 0
      %p81 = por %p79, %p80
      %p82 = scmp.ne.s32.totalorder %s70, %s71
      %p83 = scmp.eq.s32.totalorder %s19, 1
      %p84 = por %p82, %p83
      %p86 = scmp.ne.s32.totalorder %s71, %s85
      %p87 = scmp.eq.s32.totalorder %s19, 0
      %p88 = por %p86, %p87
      %s89 = ssub.s32 %s13, %s20
      %p90 = scmp.eq.s32.totalorder %s89, 0
      %s92 = sadd.s32 %s91, 1
      %s93 = scalar_select %p90, %s91, %s92
      %p96 = pneg %p90
      %p97 = scmp.eq.s32.totalorder %s13, 1
      %p98 = por %p96, %p97
      %p99 = scmp.ne.s32.totalorder %s91, %s94
      %p100 = scmp.eq.s32.totalorder %s13, 0
      %p101 = por %p99, %p100
      %p102 = scmp.ne.s32.totalorder %s91, %s94
      %p103 = scmp.eq.s32.totalorder %s18, 1
      %p104 = por %p102, %p103
      %p105 = scmp.ne.s32.totalorder %s94, %s95
      %p106 = scmp.eq.s32.totalorder %s18, 0
      %p107 = por %p105, %p106
      %p108 = scmp.ne.s32.totalorder %s94, %s95
      %p109 = scmp.eq.s32.totalorder %s19, 1
      %p110 = por %p108, %p109
      %p112 = scmp.ne.s32.totalorder %s95, %s111
      %p113 = scmp.eq.s32.totalorder %s19, 0
      %p114 = por %p112, %p113
      %p115 = scmp.le.s32.totalorder 1, %s13
      %p116 = scmp.lt.s32.totalorder %s13, 3
      %p117 = pnand %p115, %p116
      %p118 = pneg %p117
      // Predicated region
      $region9: #{tpu_custom_call.1} parent=5 // pred_check
        _
      $region10: #{tpu_custom_call.1} parent=5 // pred_check_branch
        %120 = sbr.rel (%p117) target = $region12
      $region11: #{tpu_custom_call.1} parent=5 // pred_region
        %s121 = ssub.s32 %s13, 1
        // Predicated region
        $region13: #{tpu_custom_call.1} parent=11 // pred_check
          %p122 = pneg %p60
        $region14: #{tpu_custom_call.1} parent=11 // pred_check_branch
          %124 = sbr.rel (%p122) target = $region16
        $region15: #{tpu_custom_call.1} parent=11 // pred_region
          _
        $region16: #{tpu_custom_call.1} parent=11 // pred_fallthru
          _
        // Predicated region
        $region17: #{tpu_custom_call.1} parent=11 // pred_check
          %p125 = pneg %p81
        $region18: #{tpu_custom_call.1} parent=11 // pred_check_branch
          %127 = sbr.rel (%p125) target = $region20
        $region19: #{tpu_custom_call.1} parent=11 // pred_region
          %129 = vsyncadd [#allocation3], 0
          %s130 = sshll.u32 %s2, 4
          %s131 = int_to_ptr.hbm [resolvable:$true] %s130
          %s132 = sshll.u32 [#allocation2], 4
          %s133 = int_to_ptr.vmem [resolvable:$true] %s132
          %138 = dma.hbm_to_vmem [thread:$0]  %s131, 6912, %s133, [#allocation3], 384, 384, 24
        $region20: #{tpu_custom_call.1} parent=11 // pred_fallthru
          _
      $region12: #{tpu_custom_call.1} parent=5 // pred_fallthru
        _
      %p139 = scmp.lt.s32.totalorder %s13, 2
      // Predicated region
      $region21: #{tpu_custom_call.1} parent=5 // pred_check
        %p140 = pneg %p139
      $region22: #{tpu_custom_call.1} parent=5 // pred_check_branch
        %142 = sbr.rel (%p140) target = $region24
      $region23: #{tpu_custom_call.1} parent=5 // pred_region
        // Predicated region
        $region25: #{tpu_custom_call.1} parent=23 // pred_check
          %p143 = pneg %p33
        $region26: #{tpu_custom_call.1} parent=23 // pred_check_branch
          %145 = sbr.rel (%p143) target = $region28
        $region27: #{tpu_custom_call.1} parent=23 // pred_region
          %p146 = scmp.lt.s32.totalorder %s13, 1
          %s147 = scalar_select %p146, %s13, 1
          %s148 = smul.addr %s147, 8
          %s149 = scalar_lea.vmem %s0, %s148
        $region28: #{tpu_custom_call.1} parent=23 // pred_fallthru
          _
      $region24: #{tpu_custom_call.1} parent=5 // pred_fallthru
        _
      %p150 = scmp.le.s32.totalorder 1, %s13
      %p151 = scmp.lt.s32.totalorder %s13, 3
      %p152 = pnand %p150, %p151
      %p153 = pneg %p152
      // Predicated region
      $region29: #{tpu_custom_call.1} parent=5 // pred_check
        _
      $region30: #{tpu_custom_call.1} parent=5 // pred_check_branch
        %155 = sbr.rel (%p152) target = $region32
      $region31: #{tpu_custom_call.1} parent=5 // pred_region
        %s156 = ssub.s32 %s13, 1
        // Predicated region
        $region33: #{tpu_custom_call.1} parent=31 // pred_check
          %p157 = pneg %p81
        $region34: #{tpu_custom_call.1} parent=31 // pred_check_branch
          %159 = sbr.rel (%p157) target = $region36
        $region35: #{tpu_custom_call.1} parent=31 // pred_region
          %161 = dma.done [#allocation3], 6912
        $region36: #{tpu_custom_call.1} parent=31 // pred_fallthru
          _
        %p162 = scmp.lt.s32.totalorder %s18, 1
        %s163 = scalar_select %p162, %s18, 1
        %s164 = smul.addr %s163, 8
        %s165 = scalar_lea.vmem %s0, %s164
        %p166 = pneg %p39
        %p167 = pneg %p36
        %p168 = pneg %p60
        %p169 = pneg %p57
        %p170 = pneg %p81
        %p171 = pneg %p78
        %p172 = pneg %p107
        %p173 = pneg %p104
        %s174 = sand.u32 %s94, 1
        %s175 = scalar_lea.sflag [#allocation4], %s174
        %s176 = sand.u32 %s94, 1
        %s177 = smul.addr %s176, 48
        %s178 = scalar_lea.vmem [#allocation5], %s177
        %p179 = scmp.lt.s32.totalorder %s18, 1
        %s180 = scalar_select %p179, %s18, 1
        %s181 = smul.addr %s180, 8
        %s182 = scalar_lea.vmem %s0, %s181
        %v184 = vld [vmem:[%s182] sm:$0xff]
        %v185 = vcvt.s32.f32 %v184
        %v186 = vpack.c.bf16 %v185, %v185
        %v187 = vld [vmem:[%s1] sm:$0xff]
        %v189 = vunpack.c.l.b16 %v187
        %v190 = vunpack.c.h.b16 %v187
        %v191 = vpack.c.b16 %v189, %v189
        %v192 = vpack.c.b16 %v190, %v190
        %vm193 = vcmask 64512
        %v195 = vsel %vm193, %v186, 0
        %vm197 = vcmask 1043456
        %v199 = vsel %vm197, %v191, 0
        %v202 = vsel %vm197, %v192, 0
        %204 = vmatpush.bf16.msra.mxu0 0
        %205 = vmatpush.bf16.msra.mxu0 0
        %206 = vmatpush.bf16.msra.mxu0 0
        %207 = vmatpush.bf16.msra.mxu0 0
        %208 = vmatpush.bf16.msra.mxu0 0
        %209 = vmatpush.bf16.msra.mxu0 0
        %210 = vmatpush.bf16.msra.mxu0 0
        %211 = vmatpush.bf16.msra.mxu0 %v199
        %212 = vmatmul.bf16.gmra.mxu0 %v195
        %v213 = vpop.f32.mrf.mxu0
        %v214 = vadd.f32 0.0, %v213
        %v215 = vpop.f32.mrf.mxu0
        %216 = vdwg.mxu0
        %217 = vmatpush.bf16.msra.mxu0 0
        %218 = vmatpush.bf16.msra.mxu0 0
        %219 = vmatpush.bf16.msra.mxu0 0
        %220 = vmatpush.bf16.msra.mxu0 0
        %221 = vmatpush.bf16.msra.mxu0 0
        %222 = vmatpush.bf16.msra.mxu0 0
        %223 = vmatpush.bf16.msra.mxu0 0
        %224 = vmatpush.bf16.msra.mxu0 %v202
        %225 = vmatmul.bf16.gmra.mxu0 %v195
        %v226 = vpop.f32.mrf.mxu0
        %v227 = vadd.f32 0.0, %v226
        %v228 = vpop.f32.mrf.mxu0
        %229 = vdwg.mxu0
        %v230 = vlaneseq
        %v231 = vand.u32 %v230, 127
        %v232 = vadd.s32 %v231, 128
        %v233 = vcvt.s32.f32 %v231
        %v234 = vcvt.s32.f32 %v232
        %v235 = vsub.f32 %v233, %v214
        %v236 = vsub.f32 %v234, %v227
        %v237 = vand.u32 2147483647, %v235
        %v238 = vand.u32 2147483647, %v236
        %vm239 = vcmp.lt.f32.partialorder %v237, 0.5
        %vm240 = vcmp.lt.f32.partialorder %v238, 0.5
        %v241 = vsel %vm239, 1, 0
        %v242 = vsel %vm240, 1, 0
        %v243 = vcvt.s32.f32 %v241
        %v244 = vcvt.s32.f32 %v242
        %v245 = vpack.c.bf16 %v243, %v243
        %v246 = vpack.c.bf16 %v244, %v244
        %v247 = vld [vmem:[#allocation2] sm:$0xff]
        %v248 = vld [vmem:[#allocation2 + $0x8] sm:$0xff]
        %v249 = vld [vmem:[#allocation2 + $0x10] sm:$0xff]
        %v250 = vld [vmem:[#allocation2 + $0x18] sm:$0xff]
        %v251 = vld [vmem:[#allocation2 + $0x20] sm:$0xff]
        %v252 = vld [vmem:[#allocation2 + $0x28] sm:$0xff]
        %v253 = vld [vmem:[#allocation2 + $0x30] sm:$0xff]
        %v254 = vld [vmem:[#allocation2 + $0x38] sm:$0xff]
        %v255 = vld [vmem:[#allocation2 + $0x40] sm:$0xff]
        %v256 = vld [vmem:[#allocation2 + $0x48] sm:$0xff]
        %v257 = vld [vmem:[#allocation2 + $0x50] sm:$0xff]
        %v258 = vld [vmem:[#allocation2 + $0x58] sm:$0xff]
        %v259 = vld [vmem:[#allocation2 + $0x60] sm:$0xff]
        %v260 = vld [vmem:[#allocation2 + $0x68] sm:$0xff]
        %v261 = vld [vmem:[#allocation2 + $0x70] sm:$0xff]
        %v262 = vld [vmem:[#allocation2 + $0x78] sm:$0xff]
        %v263 = vld [vmem:[#allocation2 + $0x80] sm:$0xff]
        %v264 = vld [vmem:[#allocation2 + $0x88] sm:$0xff]
        %v265 = vld [vmem:[#allocation2 + $0x90] sm:$0xff]
        %v266 = vld [vmem:[#allocation2 + $0x98] sm:$0xff]
        %v267 = vld [vmem:[#allocation2 + $0xa0] sm:$0xff]
        %v268 = vld [vmem:[#allocation2 + $0xa8] sm:$0xff]
        %v269 = vld [vmem:[#allocation2 + $0xb0] sm:$0xff]
        %v270 = vld [vmem:[#allocation2 + $0xb8] sm:$0xff]
        %v271 = vld [vmem:[#allocation2 + $0xc0] sm:$0xff]
        %v272 = vld [vmem:[#allocation2 + $0xc8] sm:$0xff]
        %v273 = vld [vmem:[#allocation2 + $0xd0] sm:$0xff]
        %v274 = vld [vmem:[#allocation2 + $0xd8] sm:$0xff]
        %v275 = vld [vmem:[#allocation2 + $0xe0] sm:$0xff]
        %v276 = vld [vmem:[#allocation2 + $0xe8] sm:$0xff]
        %v277 = vld [vmem:[#allocation2 + $0xf0] sm:$0xff]
        %v278 = vld [vmem:[#allocation2 + $0xf8] sm:$0xff]
        %v279 = vld [vmem:[#allocation2 + $0x100] sm:$0xff]
        %v280 = vld [vmem:[#allocation2 + $0x108] sm:$0xff]
        %v281 = vld [vmem:[#allocation2 + $0x110] sm:$0xff]
        %v282 = vld [vmem:[#allocation2 + $0x118] sm:$0xff]
        %v283 = vld [vmem:[#allocation2 + $0x120] sm:$0xff]
        %v284 = vld [vmem:[#allocation2 + $0x128] sm:$0xff]
        %v285 = vld [vmem:[#allocation2 + $0x130] sm:$0xff]
        %v286 = vld [vmem:[#allocation2 + $0x138] sm:$0xff]
        %v287 = vld [vmem:[#allocation2 + $0x140] sm:$0xff]
        %v288 = vld [vmem:[#allocation2 + $0x148] sm:$0xff]
        %v289 = vld [vmem:[#allocation2 + $0x150] sm:$0xff]
        %v290 = vld [vmem:[#allocation2 + $0x158] sm:$0xff]
        %v291 = vld [vmem:[#allocation2 + $0x160] sm:$0xff]
        %v292 = vld [vmem:[#allocation2 + $0x168] sm:$0xff]
        %v293 = vld [vmem:[#allocation2 + $0x170] sm:$0xff]
        %v294 = vld [vmem:[#allocation2 + $0x178] sm:$0xff]
        %v295 = vld [vmem:[#allocation2 + $0x180] sm:$0xff]
        %v296 = vld [vmem:[#allocation2 + $0x188] sm:$0xff]
        %v297 = vld [vmem:[#allocation2 + $0x190] sm:$0xff]
        %v298 = vld [vmem:[#allocation2 + $0x198] sm:$0xff]
        %v299 = vld [vmem:[#allocation2 + $0x1a0] sm:$0xff]
        %v300 = vld [vmem:[#allocation2 + $0x1a8] sm:$0xff]
        %v355 = vunpack.c.l.b16 %v247
        %v356 = vunpack.c.h.b16 %v247
        %v357 = vunpack.c.l.b16 %v248
        %v358 = vunpack.c.h.b16 %v248
        %v359 = vunpack.c.l.b16 %v249
        %v360 = vunpack.c.h.b16 %v249
        %v361 = vunpack.c.l.b16 %v250
        %v362 = vunpack.c.h.b16 %v250
        %v363 = vunpack.c.l.b16 %v251
        %v364 = vunpack.c.h.b16 %v251
        %v365 = vunpack.c.l.b16 %v252
        %v366 = vunpack.c.h.b16 %v252
        %v367 = vunpack.c.l.b16 %v253
        %v368 = vunpack.c.h.b16 %v253
        %v369 = vunpack.c.l.b16 %v254
        %v370 = vunpack.c.h.b16 %v254
        %v371 = vunpack.c.l.b16 %v255
        %v372 = vunpack.c.h.b16 %v255
        %v373 = vunpack.c.l.b16 %v256
        %v374 = vunpack.c.h.b16 %v256
        %v375 = vunpack.c.l.b16 %v257
        %v376 = vunpack.c.h.b16 %v257
        %v377 = vunpack.c.l.b16 %v258
        %v378 = vunpack.c.h.b16 %v258
        %v379 = vunpack.c.l.b16 %v259
        %v380 = vunpack.c.h.b16 %v259
        %v381 = vunpack.c.l.b16 %v260
        %v382 = vunpack.c.h.b16 %v260
        %v383 = vunpack.c.l.b16 %v261
        %v384 = vunpack.c.h.b16 %v261
        %v385 = vunpack.c.l.b16 %v262
        %v386 = vunpack.c.h.b16 %v262
        %v387 = vunpack.c.l.b16 %v263
        %v388 = vunpack.c.h.b16 %v263
        %v389 = vunpack.c.l.b16 %v264
        %v390 = vunpack.c.h.b16 %v264
        %v391 = vunpack.c.l.b16 %v265
        %v392 = vunpack.c.h.b16 %v265
        %v393 = vunpack.c.l.b16 %v266
        %v394 = vunpack.c.h.b16 %v266
        %v395 = vunpack.c.l.b16 %v267
        %v396 = vunpack.c.h.b16 %v267
        %v397 = vunpack.c.l.b16 %v268
        %v398 = vunpack.c.h.b16 %v268
        %v399 = vunpack.c.l.b16 %v269
        %v400 = vunpack.c.h.b16 %v269
        %v401 = vunpack.c.l.b16 %v270
        %v402 = vunpack.c.h.b16 %v270
        %v403 = vunpack.c.l.b16 %v271
        %v404 = vunpack.c.h.b16 %v271
        %v405 = vunpack.c.l.b16 %v272
        %v406 = vunpack.c.h.b16 %v272
        %v407 = vunpack.c.l.b16 %v273
        %v408 = vunpack.c.h.b16 %v273
        %v409 = vunpack.c.l.b16 %v274
        %v410 = vunpack.c.h.b16 %v274
        %v411 = vunpack.c.l.b16 %v275
        %v412 = vunpack.c.h.b16 %v275
        %v413 = vunpack.c.l.b16 %v276
        %v414 = vunpack.c.h.b16 %v276
        %v415 = vunpack.c.l.b16 %v277
        %v416 = vunpack.c.h.b16 %v277
        %v417 = vunpack.c.l.b16 %v278
        %v418 = vunpack.c.h.b16 %v278
        %v419 = vunpack.c.l.b16 %v279
        %v420 = vunpack.c.h.b16 %v279
        %v421 = vunpack.c.l.b16 %v280
        %v422 = vunpack.c.h.b16 %v280
        %v423 = vunpack.c.l.b16 %v281
        %v424 = vunpack.c.h.b16 %v281
        %v425 = vunpack.c.l.b16 %v282
        %v426 = vunpack.c.h.b16 %v282
        %v427 = vunpack.c.l.b16 %v283
        %v428 = vunpack.c.h.b16 %v283
        %v429 = vunpack.c.l.b16 %v284
        %v430 = vunpack.c.h.b16 %v284
        %v431 = vunpack.c.l.b16 %v285
        %v432 = vunpack.c.h.b16 %v285
        %v433 = vunpack.c.l.b16 %v286
        %v434 = vunpack.c.h.b16 %v286
        %v435 = vunpack.c.l.b16 %v287
        %v436 = vunpack.c.h.b16 %v287
        %v437 = vunpack.c.l.b16 %v288
        %v438 = vunpack.c.h.b16 %v288
        %v439 = vunpack.c.l.b16 %v289
        %v440 = vunpack.c.h.b16 %v289
        %v441 = vunpack.c.l.b16 %v290
        %v442 = vunpack.c.h.b16 %v290
        %v443 = vunpack.c.l.b16 %v291
        %v444 = vunpack.c.h.b16 %v291
        %v445 = vunpack.c.l.b16 %v292
        %v446 = vunpack.c.h.b16 %v292
        %v447 = vunpack.c.l.b16 %v293
        %v448 = vunpack.c.h.b16 %v293
        %v449 = vunpack.c.l.b16 %v294
        %v450 = vunpack.c.h.b16 %v294
        %v451 = vunpack.c.l.b16 %v295
        %v452 = vunpack.c.h.b16 %v295
        %v453 = vunpack.c.l.b16 %v296
        %v454 = vunpack.c.h.b16 %v296
        %v455 = vunpack.c.l.b16 %v297
        %v456 = vunpack.c.h.b16 %v297
        %v457 = vunpack.c.l.b16 %v298
        %v458 = vunpack.c.h.b16 %v298
        %v459 = vunpack.c.l.b16 %v299
        %v460 = vunpack.c.h.b16 %v299
        %v461 = vunpack.c.l.b16 %v300
        %v462 = vunpack.c.h.b16 %v300
        %v463 = vpack.c.b16 %v361, %v355
        %v464 = vpack.c.b16 %v362, %v356
        %v465 = vpack.c.b16 %v363, %v357
        %v466 = vpack.c.b16 %v364, %v358
        %v467 = vpack.c.b16 %v365, %v359
        %v468 = vpack.c.b16 %v366, %v360
        %v469 = vpack.c.b16 %v373, %v367
        %v470 = vpack.c.b16 %v374, %v368
        %v471 = vpack.c.b16 %v375, %v369
        %v472 = vpack.c.b16 %v376, %v370
        %v473 = vpack.c.b16 %v377, %v371
        %v474 = vpack.c.b16 %v378, %v372
        %v475 = vpack.c.b16 %v385, %v379
        %v476 = vpack.c.b16 %v386, %v380
        %v477 = vpack.c.b16 %v387, %v381
        %v478 = vpack.c.b16 %v388, %v382
        %v479 = vpack.c.b16 %v389, %v383
        %v480 = vpack.c.b16 %v390, %v384
        %v481 = vpack.c.b16 %v397, %v391
        %v482 = vpack.c.b16 %v398, %v392
        %v483 = vpack.c.b16 %v399, %v393
        %v484 = vpack.c.b16 %v400, %v394
        %v485 = vpack.c.b16 %v401, %v395
        %v486 = vpack.c.b16 %v402, %v396
        %v487 = vpack.c.b16 %v409, %v403
        %v488 = vpack.c.b16 %v410, %v404
        %v489 = vpack.c.b16 %v411, %v405
        %v490 = vpack.c.b16 %v412, %v406
        %v491 = vpack.c.b16 %v413, %v407
        %v492 = vpack.c.b16 %v414, %v408
        %v493 = vpack.c.b16 %v421, %v415
        %v494 = vpack.c.b16 %v422, %v416
        %v495 = vpack.c.b16 %v423, %v417
        %v496 = vpack.c.b16 %v424, %v418
        %v497 = vpack.c.b16 %v425, %v419
        %v498 = vpack.c.b16 %v426, %v420
        %v499 = vpack.c.b16 %v433, %v427
        %v500 = vpack.c.b16 %v434, %v428
        %v501 = vpack.c.b16 %v435, %v429
        %v502 = vpack.c.b16 %v436, %v430
        %v503 = vpack.c.b16 %v437, %v431
        %v504 = vpack.c.b16 %v438, %v432
        %v505 = vpack.c.b16 %v445, %v439
        %v506 = vpack.c.b16 %v446, %v440
        %v507 = vpack.c.b16 %v447, %v441
        %v508 = vpack.c.b16 %v448, %v442
        %v509 = vpack.c.b16 %v449, %v443
        %v510 = vpack.c.b16 %v450, %v444
        %v511 = vpack.c.b16 %v457, %v451
        %v512 = vpack.c.b16 %v458, %v452
        %v513 = vpack.c.b16 %v459, %v453
        %v514 = vpack.c.b16 %v460, %v454
        %v515 = vpack.c.b16 %v461, %v455
        %v516 = vpack.c.b16 %v462, %v456
        %vm571 = vcmask 130048
        %v573 = vsel %vm571, %v246, 0
        %575 = vmatpush.bf16.msra.mxu0 %v505
        %576 = vmatpush.bf16.msra.mxu0 %v499
        %577 = vmatpush.bf16.msra.mxu0 %v493
        %578 = vmatpush.bf16.msra.mxu0 %v487
        %579 = vmatpush.bf16.msra.mxu0 %v481
        %580 = vmatpush.bf16.msra.mxu0 %v475
        %581 = vmatpush.bf16.msra.mxu0 %v469
        %582 = vmatpush.bf16.msra.mxu0 %v463
        %583 = vmatmul.bf16.gmra.mxu0 %v245
        %v584 = vpop.f32.mrf.mxu0
        %v585 = vadd.f32 0.0, %v584
        %v586 = vpop.f32.mrf.mxu0
        %587 = vdwg.mxu0
        %588 = vmatpush.bf16.msra.mxu0 0
        %589 = vmatpush.bf16.msra.mxu0 0
        %590 = vmatpush.bf16.msra.mxu0 0
        %591 = vmatpush.bf16.msra.mxu0 0
        %592 = vmatpush.bf16.msra.mxu0 0
        %593 = vmatpush.bf16.msra.mxu0 0
        %594 = vmatpush.bf16.msra.mxu0 0
        %595 = vmatpush.bf16.msra.mxu0 %v511
        %596 = vmatmul.bf16.gmra.mxu0 %v573
        %v597 = vpop.f32.mrf.mxu0
        %v598 = vadd.f32 %v585, %v597
        %v599 = vpop.f32.mrf.mxu0
        %600 = vdwg.mxu0
        %601 = vmatpush.bf16.msra.mxu0 %v506
        %602 = vmatpush.bf16.msra.mxu0 %v500
        %603 = vmatpush.bf16.msra.mxu0 %v494
        %604 = vmatpush.bf16.msra.mxu0 %v488
        %605 = vmatpush.bf16.msra.mxu0 %v482
        %606 = vmatpush.bf16.msra.mxu0 %v476
        %607 = vmatpush.bf16.msra.mxu0 %v470
        %608 = vmatpush.bf16.msra.mxu0 %v464
        %609 = vmatmul.bf16.gmra.mxu0 %v245
        %v610 = vpop.f32.mrf.mxu0
        %v611 = vadd.f32 0.0, %v610
        %v612 = vpop.f32.mrf.mxu0
        %613 = vdwg.mxu0
        %614 = vmatpush.bf16.msra.mxu0 0
        %615 = vmatpush.bf16.msra.mxu0 0
        %616 = vmatpush.bf16.msra.mxu0 0
        %617 = vmatpush.bf16.msra.mxu0 0
        %618 = vmatpush.bf16.msra.mxu0 0
        %619 = vmatpush.bf16.msra.mxu0 0
        %620 = vmatpush.bf16.msra.mxu0 0
        %621 = vmatpush.bf16.msra.mxu0 %v512
        %622 = vmatmul.bf16.gmra.mxu0 %v573
        %v623 = vpop.f32.mrf.mxu0
        %v624 = vadd.f32 %v611, %v623
        %v625 = vpop.f32.mrf.mxu0
        %626 = vdwg.mxu0
        %627 = vmatpush.bf16.msra.mxu0 %v507
        %628 = vmatpush.bf16.msra.mxu0 %v501
        %629 = vmatpush.bf16.msra.mxu0 %v495
        %630 = vmatpush.bf16.msra.mxu0 %v489
        %631 = vmatpush.bf16.msra.mxu0 %v483
        %632 = vmatpush.bf16.msra.mxu0 %v477
        %633 = vmatpush.bf16.msra.mxu0 %v471
        %634 = vmatpush.bf16.msra.mxu0 %v465
        %635 = vmatmul.bf16.gmra.mxu0 %v245
        %v636 = vpop.f32.mrf.mxu0
        %v637 = vadd.f32 0.0, %v636
        %v638 = vpop.f32.mrf.mxu0
        %639 = vdwg.mxu0
        %640 = vmatpush.bf16.msra.mxu0 0
        %641 = vmatpush.bf16.msra.mxu0 0
        %642 = vmatpush.bf16.msra.mxu0 0
        %643 = vmatpush.bf16.msra.mxu0 0
        %644 = vmatpush.bf16.msra.mxu0 0
        %645 = vmatpush.bf16.msra.mxu0 0
        %646 = vmatpush.bf16.msra.mxu0 0
        %647 = vmatpush.bf16.msra.mxu0 %v513
        %648 = vmatmul.bf16.gmra.mxu0 %v573
        %v649 = vpop.f32.mrf.mxu0
        %v650 = vadd.f32 %v637, %v649
        %v651 = vpop.f32.mrf.mxu0
        %652 = vdwg.mxu0
        %653 = vmatpush.bf16.msra.mxu0 %v508
        %654 = vmatpush.bf16.msra.mxu0 %v502
        %655 = vmatpush.bf16.msra.mxu0 %v496
        %656 = vmatpush.bf16.msra.mxu0 %v490
        %657 = vmatpush.bf16.msra.mxu0 %v484
        %658 = vmatpush.bf16.msra.mxu0 %v478
        %659 = vmatpush.bf16.msra.mxu0 %v472
        %660 = vmatpush.bf16.msra.mxu0 %v466
        %661 = vmatmul.bf16.gmra.mxu0 %v245
        %v662 = vpop.f32.mrf.mxu0
        %v663 = vadd.f32 0.0, %v662
        %v664 = vpop.f32.mrf.mxu0
        %665 = vdwg.mxu0
        %666 = vmatpush.bf16.msra.mxu0 0
        %667 = vmatpush.bf16.msra.mxu0 0
        %668 = vmatpush.bf16.msra.mxu0 0
        %669 = vmatpush.bf16.msra.mxu0 0
        %670 = vmatpush.bf16.msra.mxu0 0
        %671 = vmatpush.bf16.msra.mxu0 0
        %672 = vmatpush.bf16.msra.mxu0 0
        %673 = vmatpush.bf16.msra.mxu0 %v514
        %674 = vmatmul.bf16.gmra.mxu0 %v573
        %v675 = vpop.f32.mrf.mxu0
        %v676 = vadd.f32 %v663, %v675
        %v677 = vpop.f32.mrf.mxu0
        %678 = vdwg.mxu0
        %679 = vmatpush.bf16.msra.mxu0 %v509
        %680 = vmatpush.bf16.msra.mxu0 %v503
        %681 = vmatpush.bf16.msra.mxu0 %v497
        %682 = vmatpush.bf16.msra.mxu0 %v491
        %683 = vmatpush.bf16.msra.mxu0 %v485
        %684 = vmatpush.bf16.msra.mxu0 %v479
        %685 = vmatpush.bf16.msra.mxu0 %v473
        %686 = vmatpush.bf16.msra.mxu0 %v467
        %687 = vmatmul.bf16.gmra.mxu0 %v245
        %v688 = vpop.f32.mrf.mxu0
        %v689 = vadd.f32 0.0, %v688
        %v690 = vpop.f32.mrf.mxu0
        %691 = vdwg.mxu0
        %692 = vmatpush.bf16.msra.mxu0 0
        %693 = vmatpush.bf16.msra.mxu0 0
        %694 = vmatpush.bf16.msra.mxu0 0
        %695 = vmatpush.bf16.msra.mxu0 0
        %696 = vmatpush.bf16.msra.mxu0 0
        %697 = vmatpush.bf16.msra.mxu0 0
        %698 = vmatpush.bf16.msra.mxu0 0
        %699 = vmatpush.bf16.msra.mxu0 %v515
        %700 = vmatmul.bf16.gmra.mxu0 %v573
        %v701 = vpop.f32.mrf.mxu0
        %v702 = vadd.f32 %v689, %v701
        %v703 = vpop.f32.mrf.mxu0
        %704 = vdwg.mxu0
        %705 = vmatpush.bf16.msra.mxu0 %v510
        %706 = vmatpush.bf16.msra.mxu0 %v504
        %707 = vmatpush.bf16.msra.mxu0 %v498
        %708 = vmatpush.bf16.msra.mxu0 %v492
        %709 = vmatpush.bf16.msra.mxu0 %v486
        %710 = vmatpush.bf16.msra.mxu0 %v480
        %711 = vmatpush.bf16.msra.mxu0 %v474
        %712 = vmatpush.bf16.msra.mxu0 %v468
        %713 = vmatmul.bf16.gmra.mxu0 %v245
        %v714 = vpop.f32.mrf.mxu0
        %v715 = vadd.f32 0.0, %v714
        %v716 = vpop.f32.mrf.mxu0
        %717 = vdwg.mxu0
        %718 = vmatpush.bf16.msra.mxu0 0
        %719 = vmatpush.bf16.msra.mxu0 0
        %720 = vmatpush.bf16.msra.mxu0 0
        %721 = vmatpush.bf16.msra.mxu0 0
        %722 = vmatpush.bf16.msra.mxu0 0
        %723 = vmatpush.bf16.msra.mxu0 0
        %724 = vmatpush.bf16.msra.mxu0 0
        %725 = vmatpush.bf16.msra.mxu0 %v516
        %726 = vmatmul.bf16.gmra.mxu0 %v573
        %v727 = vpop.f32.mrf.mxu0
        %v728 = vadd.f32 %v715, %v727
        %v729 = vpop.f32.mrf.mxu0
        %730 = vdwg.mxu0
        %731 = vst [vmem:[%s178] sm:$0xff] %v598
        %732 = vst [vmem:[%s178 + $0x8] sm:$0xff] %v624
        %733 = vst [vmem:[%s178 + $0x10] sm:$0xff] %v650
        %734 = vst [vmem:[%s178 + $0x18] sm:$0xff] %v676
        %735 = vst [vmem:[%s178 + $0x20] sm:$0xff] %v702
        %736 = vst [vmem:[%s178 + $0x28] sm:$0xff] %v728
        %s737 = sand.u32 %s94, 1
        %s738 = scalar_lea.sflag [#allocation4], %s737
        %s739 = sand.u32 %s94, 1
        %s740 = smul.addr %s739, 48
        %s741 = scalar_lea.vmem [#allocation5], %s740
        // Predicated region
        $region37: #{tpu_custom_call.1} parent=31 // pred_check
          %p742 = pneg %p104
        $region38: #{tpu_custom_call.1} parent=31 // pred_check_branch
          %744 = sbr.rel (%p742) target = $region40
        $region39: #{tpu_custom_call.1} parent=31 // pred_region
          %746 = vsyncadd %s738, 0
          %s747 = smul.addr %s18, 6
          %s748 = smul.addr %s747, 8
          %s749 = scalar_lea.hbm %s3, %s748
          %s751 = sshll.u32 %s741, 4
          %s752 = int_to_ptr.vmem [resolvable:$true] %s751
          %s753 = sshll.u32 %s749, 4
          %s754 = int_to_ptr.hbm [resolvable:$true] %s753
          %756 = dma.vmem_to_hbm [thread:$0]  %s752, 768, %s754, %s738
        $region40: #{tpu_custom_call.1} parent=31 // pred_fallthru
          _
      $region32: #{tpu_custom_call.1} parent=5 // pred_fallthru
        _
      %p757 = scmp.le.s32.totalorder 2, %s13
      // Predicated region
      $region41: #{tpu_custom_call.1} parent=5 // pred_check
        %p758 = pneg %p757
      $region42: #{tpu_custom_call.1} parent=5 // pred_check_branch
        %760 = sbr.rel (%p758) target = $region44
      $region43: #{tpu_custom_call.1} parent=5 // pred_region
        %s761 = ssub.s32 %s13, 2
        // Predicated region
        $region45: #{tpu_custom_call.1} parent=43 // pred_check
          %p762 = pneg %p110
        $region46: #{tpu_custom_call.1} parent=43 // pred_check_branch
          %764 = sbr.rel (%p762) target = $region48
        $region47: #{tpu_custom_call.1} parent=43 // pred_region
          %s765 = sand.u32 %s95, 1
          %s766 = scalar_lea.sflag [#allocation4], %s765
          %s767 = sand.u32 %s95, 1
          %s768 = smul.addr %s767, 48
          %s769 = scalar_lea.vmem [#allocation5], %s768
          %771 = dma.done %s766, 768
        $region48: #{tpu_custom_call.1} parent=43 // pred_fallthru
          _
      $region44: #{tpu_custom_call.1} parent=5 // pred_fallthru
        _
    $region6: #{tpu_custom_call.1} parent=1 // loop_footer
      %s17 = sadd.s32 1, %s13
    $region7: #{tpu_custom_call.1} parent=1 // loop_footer_branch
      %12 = sbr.rel target = $region3
    $region8: #{tpu_custom_call.1} parent=1 // loop_exit
      _
    %772 = vsyncpa [#allocation3], 1
    %s773 = scalar_lea.sflag [#allocation3], 1
    %774 = vsyncpa %s773, 1
    %775 = vsyncpa [#allocation4], 1
    %s776 = scalar_lea.sflag [#allocation4], 1
    %777 = vsyncpa %s776, 1

</llo_original>
